<compile_context>
chip_gen: v7x
topology: tpu7x:2x2x1
jax: 0.10.0
libtpu: 0.0.40
codegen_flags: <defaults>
</compile_context>

<pallas_src>
import functools

import jax
import jax.numpy as jnp
from jax import lax
from jax.experimental import pallas as pl
from jax.experimental.pallas import tpu as pltpu

EPS = 1e-20
_NEG_BIG = -1e30  # fill for padded class columns (acts as -inf in softmax/argmax)


def _round_up(x, m):
    return (x + m - 1) // m * m


def _vmem_limit_bytes():
    """Generation-aware VMEM budget (v7x: 64 MiB phys -> ~56 MiB; v5e/v6e -> 100 MiB)."""
    try:
        cap = int(pltpu.get_tpu_info().vmem_capacity_bytes)
    except Exception:
        cap = 64 * 1024 * 1024  # conservative (v7x) fallback, also used off-TPU
    return int(min(cap * 7 // 8, 100 * 1024 * 1024))


def _gumbel_softmax_kernel(x_ref, w_ref, b_ref, u_ref,
                           logits_ref, prob_ref, y_ref,
                           *, inv_temperature, hard, fast_t1):
    # MXU matmul in the caller dtype (bf16 fast path), f32 accumulate; bias in f32.
    bias = b_ref[...].astype(jnp.float32)
    logits = jnp.dot(x_ref[...], w_ref[...],
                     preferred_element_type=jnp.float32) + bias
    logits_ref[...] = logits.astype(logits_ref.dtype)

    # prob = softmax(logits): exact normalization (cheap vs. the store-bound roofline).
    row_max = jnp.max(logits, axis=-1, keepdims=True)
    e = jnp.exp(logits - row_max)
    denom = jnp.sum(e, axis=-1, keepdims=True)
    prob_ref[...] = (e / denom).astype(prob_ref.dtype)

    # Gumbel noise: g = -log(E + eps) with E = -log(u + eps), u ~ U[0,1).
    u = u_ref[...].astype(jnp.float32)
    expo = -jnp.log(u + EPS)

    if hard:
        # Forward value of the straight-through path is the one-hot of y, and
        # argmax((logits+g)/T) == argmax(logits+g): skip the second softmax entirely.
        z = logits - jnp.log(expo + EPS)
        z_max = jnp.max(z, axis=-1, keepdims=True)
        col = lax.broadcasted_iota(jnp.int32, z.shape, 1)
        first = jnp.min(jnp.where(z == z_max, col, z.shape[-1]),
                        axis=-1, keepdims=True)          # ties -> first max
        y = (col == first).astype(jnp.float32)
    elif fast_t1:
        # T == 1: exp(logits + g) == exp(logits) / (E + eps) -> reuse prob's exp.
        num = e / (expo + EPS)
        y = num / jnp.sum(num, axis=-1, keepdims=True)
    else:
        z = (logits - jnp.log(expo + EPS)) * inv_temperature
        z_max = jnp.max(z, axis=-1, keepdims=True)
        ez = jnp.exp(z - z_max)
        y = ez / jnp.sum(ez, axis=-1, keepdims=True)

    y_ref[...] = y.astype(y_ref.dtype)


def gumbel_softmax_forward(x, w, b, key, temperature=1.0, hard=False,
                           out_dtype=jnp.float32, max_tile_m=2048):
    """GumbelSoftmax.forward.

    x: [..., f_dim]; w: (f_dim, c_dim); b: (c_dim,); key: jax PRNG key for the noise.
    Returns (logits, prob, y), each (M, c_dim) in out_dtype, M = prod(x.shape[:-1]).
    (Forward only; the straight-through backward would need a custom_vjp.)
    """
    f_dim, c_dim = w.shape
    x2 = x.reshape(-1, f_dim)
    m = x2.shape[0]
    out_dtype = jnp.dtype(out_dtype)

    # Lane-dense class axis (multiple of 128) -> unmasked vst on the output tiles.
    c_pad = _round_up(c_dim, 128)

    # --- VMEM-budget-driven row tile -------------------------------------------
    vmem_limit = _vmem_limit_bytes()
    budget = (vmem_limit * 4) // 5                      # headroom for compiler scratch
    x_bytes = jnp.dtype(x2.dtype).itemsize
    w_bytes = jnp.dtype(w.dtype).itemsize
    # w/b may be double-buffered by the pipeline despite constant index_maps.
    resident = 2 * f_dim * c_pad * w_bytes + 2 * c_pad * 4
    per_row = (2 * f_dim * x_bytes                      # x tile (double-buffered)
               + 2 * c_pad * 4                          # noise tile (double-buffered)
               + 3 * 2 * c_pad * out_dtype.itemsize     # 3 output tiles
               + 6 * c_pad * 4)                         # in-kernel f32 temporaries
    tm = max(8, min((budget - resident) // per_row, max_tile_m))
    # Keep >=2 grid steps whenever m > 8 so v7x's two TensorCores both get work.
    tm = min(tm, _round_up(max((m + 1) // 2, 8), 8))
    tm = max((int(tm) // 8) * 8, 8)
    m_pad = _round_up(max(m, 8), tm)
    grid = m_pad // tm

    # --- Padding (only when needed) ---------------------------------------------
    if c_pad != c_dim:
        w_p = jnp.zeros((f_dim, c_pad), w.dtype).at[:, :c_dim].set(w)
        b_p = jnp.full((1, c_pad), _NEG_BIG, jnp.float32).at[:, :c_dim].set(
            b.astype(jnp.float32).reshape(1, c_dim))
    else:
        w_p = w
        b_p = b.astype(jnp.float32).reshape(1, c_dim)
    if m_pad != m:
        x2 = jnp.pad(x2, ((0, m_pad - m), (0, 0)))

    # U[0,1) noise (torch.rand equivalent), streamed in as a tiled input.
    u = jax.random.uniform(key, (m_pad, c_pad), jnp.float32)

    temperature = float(temperature)
    kernel = functools.partial(
        _gumbel_softmax_kernel,
        inv_temperature=1.0 / temperature,
        hard=bool(hard),
        fast_t1=(temperature == 1.0))

    out_shapes = tuple(jax.ShapeDtypeStruct((m_pad, c_pad), out_dtype)
                       for _ in range(3))
    out_spec = pl.BlockSpec((tm, c_pad), lambda i: (i, 0))

    grid_spec = pltpu.PrefetchScalarGridSpec(
        num_scalar_prefetch=0,
        grid=(grid,),
        in_specs=[
            pl.BlockSpec((tm, f_dim), lambda i: (i, 0)),     # x tile
            pl.BlockSpec((f_dim, c_pad), lambda i: (0, 0)),  # w (resident)
            pl.BlockSpec((1, c_pad), lambda i: (0, 0)),      # b (resident)
            pl.BlockSpec((tm, c_pad), lambda i: (i, 0)),     # uniform-noise tile
        ],
        out_specs=(out_spec, out_spec, out_spec),
    )

    cost = pl.CostEstimate(
        flops=2 * m_pad * f_dim * c_pad + 12 * m_pad * c_pad,
        transcendentals=4 * m_pad * c_pad,
        bytes_accessed=(x2.size * x_bytes + w_p.size * w_bytes + b_p.size * 4
                        + u.size * 4 + 3 * m_pad * c_pad * out_dtype.itemsize))

    logits, prob, y = pl.pallas_call(
        kernel,
        out_shape=out_shapes,
        grid_spec=grid_spec,
        compiler_params=pltpu.CompilerParams(
            dimension_semantics=("parallel",),
            vmem_limit_bytes=vmem_limit),
        cost_estimate=cost,
    )(x2, w_p, b_p, u)

    # Slice copies only when padding was actually applied.
    if m_pad != m or c_pad != c_dim:
        logits, prob, y = logits[:m, :c_dim], prob[:m, :c_dim], y[:m, :c_dim]
    return logits, prob, y


if __name__ == "__main__":
    key = jax.random.PRNGKey(0)
    k_x, k_w, k_b, k_u1, k_u2 = jax.random.split(key, 5)

    f_dim, c_dim = 32, 16
    batch, seq = 2, 8
    x = jax.random.normal(k_x, (batch, seq, f_dim), dtype=jnp.float32)

    # deterministic nn.Linear-style init: U(-1/sqrt(f_dim), 1/sqrt(f_dim))
    bound = 1.0 / (f_dim ** 0.5)
    w = jax.random.uniform(k_w, (f_dim, c_dim), jnp.float32, -bound, bound)
    b = jax.random.uniform(k_b, (c_dim,), jnp.float32, -bound, bound)

    m = batch * seq

    # soft path (temperature == 1 fast path)
    logits, prob, y = gumbel_softmax_forward(x, w, b, k_u1,
                                             temperature=1.0, hard=False)
    jax.block_until_ready((logits, prob, y))

    # pure-JAX reference for the deterministic parts
    logits_ref = x.reshape(-1, f_dim) @ w + b
    prob_ref = jax.nn.softmax(logits_ref, axis=-1)

    assert logits.shape == (m, c_dim)
    assert prob.shape == (m, c_dim)
    assert y.shape == (m, c_dim)
    assert jnp.allclose(logits, logits_ref, atol=2e-3, rtol=2e-3)
    assert jnp.allclose(prob, prob_ref, atol=2e-3, rtol=2e-3)
    # y uses random Gumbel noise -> check it is a valid softmax sample.
    assert jnp.allclose(jnp.sum(y, axis=-1), 1.0, atol=1e-4)
    assert bool(jnp.all(y >= 0.0)) and bool(jnp.all(y <= 1.0 + 1e-6))

    # hard (straight-through) path: every row must be an exact one-hot
    _, _, y_hard = gumbel_softmax_forward(x, w, b, k_u2,
                                          temperature=0.5, hard=True)
    jax.block_until_ready(y_hard)
    assert jnp.allclose(jnp.sum(y_hard, axis=-1), 1.0)
    assert bool(jnp.all((y_hard == 0.0) | (y_hard == 1.0)))

    print("KERNEL_OK")
</pallas_src>

<mosaic_0001>
module attributes {stable_mosaic.version = 11 : i64} {
  func.func @_gumbel_softmax_kernel(%arg0: i32, %arg1: memref<8x32xf32, #tpu.memory_space<vmem>>, %arg2: memref<32x128xf32, #tpu.memory_space<vmem>>, %arg3: memref<1x128xf32, #tpu.memory_space<vmem>>, %arg4: memref<8x128xf32, #tpu.memory_space<vmem>>, %arg5: memref<8x128xf32, #tpu.memory_space<vmem>>, %arg6: memref<8x128xf32, #tpu.memory_space<vmem>>, %arg7: memref<8x128xf32, #tpu.memory_space<vmem>>) attributes {dimension_semantics = [#tpu.dimension_semantics<parallel>], iteration_bounds = array<i64: 2>, scalar_prefetch = 0 : i64, scratch_operands = 0 : i64, tpu.core_type = #tpu.core_type<tc>, window_params = [{transform_indices = @transform_0, window_bounds = array<i64: 8, 32>}, {pipeline_mode = #tpu.pipeline_mode<synchronous>, transform_indices = @transform_1, window_bounds = array<i64: 32, 128>}, {pipeline_mode = #tpu.pipeline_mode<synchronous>, transform_indices = @transform_2, window_bounds = array<i64: 1, 128>}, {transform_indices = @transform_3, window_bounds = array<i64: 8, 128>}, {transform_indices = @transform_4, window_bounds = array<i64: 8, 128>}, {transform_indices = @transform_5, window_bounds = array<i64: 8, 128>}, {transform_indices = @transform_6, window_bounds = array<i64: 8, 128>}]} {
    %c0 = arith.constant 0 : index
    %c0_0 = arith.constant 0 : index
    %0 = vector.load %arg3[%c0, %c0_0] : memref<1x128xf32, #tpu.memory_space<vmem>>, vector<1x128xf32>
    %c0_1 = arith.constant 0 : index
    %c0_2 = arith.constant 0 : index
    %1 = vector.load %arg1[%c0_1, %c0_2] : memref<8x32xf32, #tpu.memory_space<vmem>>, vector<8x32xf32>
    %c0_3 = arith.constant 0 : index
    %c0_4 = arith.constant 0 : index
    %2 = vector.load %arg2[%c0_3, %c0_4] : memref<32x128xf32, #tpu.memory_space<vmem>>, vector<32x128xf32>
    %cst = arith.constant dense<0.000000e+00> : vector<8x128xf32>
    %3 = tpu.matmul %1, %2, %cst {dimension_numbers = #tpu.dot_dimension_numbers<[1], [0], [0], [1], [0, 0, 1, 1], [], []>} : vector<8x32xf32>, vector<32x128xf32>, vector<8x128xf32> -> vector<8x128xf32>
    %4 = vector.broadcast %0 : vector<1x128xf32> to vector<8x128xf32>
    %5 = arith.addf %3, %4 : vector<8x128xf32>
    %c0_5 = arith.constant 0 : index
    %c0_6 = arith.constant 0 : index
    %6 = vector.load %arg5[%c0_5, %c0_6] : memref<8x128xf32, #tpu.memory_space<vmem>>, vector<8x128xf32>
    tpu.vector_store %arg5[%c0_5, %c0_6], %5 {strides = array<i32>} : memref<8x128xf32, #tpu.memory_space<vmem>>, vector<8x128xf32>,
    %cst_7 = arith.constant dense<0xFF800000> : vector<8xf32>
    %7 = vector.multi_reduction <maximumf>, %5, %cst_7 [1] : vector<8x128xf32> to vector<8xf32>
    %8 = vector.shape_cast %7 : vector<8xf32> to vector<8x1xf32>
    %9 = vector.broadcast %8 : vector<8x1xf32> to vector<8x128xf32>
    %10 = arith.subf %5, %9 : vector<8x128xf32>
    %11 = math.exp %10 : vector<8x128xf32>
    %cst_8 = arith.constant dense<0.000000e+00> : vector<8xf32>
    %12 = vector.multi_reduction <add>, %11, %cst_8 [1] : vector<8x128xf32> to vector<8xf32>
    %13 = vector.shape_cast %12 : vector<8xf32> to vector<8x1xf32>
    %14 = vector.broadcast %13 : vector<8x1xf32> to vector<8x128xf32>
    %15 = arith.divf %11, %14 : vector<8x128xf32>
    %c0_9 = arith.constant 0 : index
    %c0_10 = arith.constant 0 : index
    %16 = vector.load %arg6[%c0_9, %c0_10] : memref<8x128xf32, #tpu.memory_space<vmem>>, vector<8x128xf32>
    tpu.vector_store %arg6[%c0_9, %c0_10], %15 {strides = array<i32>} : memref<8x128xf32, #tpu.memory_space<vmem>>, vector<8x128xf32>,
    %c0_11 = arith.constant 0 : index
    %c0_12 = arith.constant 0 : index
    %17 = vector.load %arg4[%c0_11, %c0_12] : memref<8x128xf32, #tpu.memory_space<vmem>>, vector<8x128xf32>
    %cst_13 = arith.constant 9.99999968E-21 : f32
    %18 = vector.broadcast %cst_13 : f32 to vector<8x128xf32>
    %19 = arith.addf %17, %18 : vector<8x128xf32>
    %20 = math.log %19 : vector<8x128xf32>
    %cst_14 = arith.constant 0.000000e+00 : f32
    %21 = vector.broadcast %cst_14 : f32 to vector<8x128xf32>
    %22 = arith.subf %21, %20 : vector<8x128xf32>
    %cst_15 = arith.constant 9.99999968E-21 : f32
    %23 = vector.broadcast %cst_15 : f32 to vector<8x128xf32>
    %24 = arith.addf %22, %23 : vector<8x128xf32>
    %25 = arith.divf %11, %24 : vector<8x128xf32>
    %cst_16 = arith.constant dense<0.000000e+00> : vector<8xf32>
    %26 = vector.multi_reduction <add>, %25, %cst_16 [1] : vector<8x128xf32> to vector<8xf32>
    %27 = vector.shape_cast %26 : vector<8xf32> to vector<8x1xf32>
    %28 = vector.broadcast %27 : vector<8x1xf32> to vector<8x128xf32>
    %29 = arith.divf %25, %28 : vector<8x128xf32>
    %c0_17 = arith.constant 0 : index
    %c0_18 = arith.constant 0 : index
    %30 = vector.load %arg7[%c0_17, %c0_18] : memref<8x128xf32, #tpu.memory_space<vmem>>, vector<8x128xf32>
    tpu.vector_store %arg7[%c0_17, %c0_18], %29 {strides = array<i32>} : memref<8x128xf32, #tpu.memory_space<vmem>>, vector<8x128xf32>,
    return
  }
  func.func @transform_0(%arg0: i32) -> (i32, i32) {
    %c0_i32 = arith.constant 0 : i32
    %c0_i32_0 = arith.constant 0 : i32
    return %arg0, %c0_i32 : i32, i32
  }
  func.func @transform_1(%arg0: i32) -> (i32, i32) {
    %c0_i32 = arith.constant 0 : i32
    %c0_i32_0 = arith.constant 0 : i32
    %c0_i32_1 = arith.constant 0 : i32
    return %c0_i32, %c0_i32_0 : i32, i32
  }
  func.func @transform_2(%arg0: i32) -> (i32, i32) {
    %c0_i32 = arith.constant 0 : i32
    %c0_i32_0 = arith.constant 0 : i32
    %c0_i32_1 = arith.constant 0 : i32
    return %c0_i32, %c0_i32_0 : i32, i32
  }
  func.func @transform_3(%arg0: i32) -> (i32, i32) {
    %c0_i32 = arith.constant 0 : i32
    %c0_i32_0 = arith.constant 0 : i32
    return %arg0, %c0_i32 : i32, i32
  }
  func.func @transform_4(%arg0: i32) -> (i32, i32) {
    %c0_i32 = arith.constant 0 : i32
    %c0_i32_0 = arith.constant 0 : i32
    return %arg0, %c0_i32 : i32, i32
  }
  func.func @transform_5(%arg0: i32) -> (i32, i32) {
    %c0_i32 = arith.constant 0 : i32
    %c0_i32_0 = arith.constant 0 : i32
    return %arg0, %c0_i32 : i32, i32
  }
  func.func @transform_6(%arg0: i32) -> (i32, i32) {
    %c0_i32 = arith.constant 0 : i32
    %c0_i32_0 = arith.constant 0 : i32
    return %arg0, %c0_i32 : i32, i32
  }
}

</mosaic_0001>

<llo_original>
// kernel: tpu_custom_call.1
$region0: #{tpu_custom_call.1}
  #allocation0 [shape = 'u32[]', space=smem, size = 0x4, offset = 0x4, fixed_abs, tag = 'smem constant byte address 0x4 - core index']
  #allocation1 [shape = 'u32[144,128]{1,0:T(1,128)}', space=vmem, size = 0x12000, scoped, tag = 'internal scratch']
  %s0 = inlined_call_operand.hbm [shape: f32[16,32], index: 0, kind: input, shape index: {}]
  %s1 = inlined_call_operand.hbm [shape: f32[32,128], index: 1, kind: input, shape index: {}]
  %s2 = inlined_call_operand.vmem [shape: f32[1,128], index: 2, kind: input, shape index: {}]
  %s3 = inlined_call_operand.hbm [shape: f32[16,128], index: 3, kind: input, shape index: {}]
  %s4 = inlined_call_operand.hbm [shape: f32[16,128], index: 4, kind: output, shape index: {0}]
  %s5 = inlined_call_operand.hbm [shape: f32[16,128], index: 5, kind: output, shape index: {1}]
  %s6 = inlined_call_operand.hbm [shape: f32[16,128], index: 6, kind: output, shape index: {2}]
  %7 = xla_tuple %s4, %s5, %s6
  %s8 = sld [smem:[#allocation0]]
  $region77: #{tpu_custom_call.1} parent=0
    _
  %s10 = ssub.s32 1, %s8
  %s11 = scalar_select 0, %s10, %s8
  $region1: #{tpu_custom_call.1} parent=0
    #allocation2 [shape = 'u8[8192]{0}', space=vmem, size = 0x2000, scoped, tag = 'input window, operand 0']
    #allocation3 [shape = 's32[2]{0}', space=sflag, size = 0x8, scoped, tag = 'scoped memory for tpu_custom_call.1']
    #allocation4 [shape = 's32[2]{0}', space=sflag, size = 0x8, scoped, tag = 'scoped memory for tpu_custom_call.1']
    #allocation5 [shape = 'u8[16384]{0}', space=vmem, size = 0x4000, scoped, tag = 'input window, operand 1, single buffered']
    #allocation6 [shape = 's32[1]{0}', space=sflag, size = 0x4, scoped, tag = 'scoped memory for tpu_custom_call.1']
    #allocation7 [shape = 'u8[8192]{0}', space=vmem, size = 0x2000, scoped, tag = 'input window, operand 3']
    #allocation8 [shape = 'u8[8192]{0}', space=vmem, size = 0x2000, scoped, tag = 'output window, operand 0']
    #allocation9 [shape = 'u8[8192]{0}', space=vmem, size = 0x2000, scoped, tag = 'output window, operand 1']
    #allocation10 [shape = 's32[2]{0}', space=sflag, size = 0x8, scoped, tag = 'scoped memory for tpu_custom_call.1']
    #allocation11 [shape = 'u8[8192]{0}', space=vmem, size = 0x2000, scoped, tag = 'output window, operand 2']
    %12 = vsyncpa [#allocation3], 0
    %s13 = scalar_lea.sflag [#allocation3], 1
    %14 = vsyncpa %s13, 0
    %15 = vsyncpa [#allocation6], 0
    %16 = vsyncpa [#allocation4], 0
    %s17 = scalar_lea.sflag [#allocation4], 1
    %18 = vsyncpa %s17, 0
    %19 = vsyncpa [#allocation10], 0
    %s20 = scalar_lea.sflag [#allocation10], 1
    %21 = vsyncpa %s20, 0
    loop: start=0, step=1, limit=4
    $region2: #{tpu_custom_call.1} parent=1 // loop_pre_header
      _
    $region3: #{tpu_custom_call.1} parent=1 // loop_header
      %s23 = sphi 0, %s27
      %p24 = scmp.ge.s32.totalorder %s23, 4
      %s33 = sphi 0, %s35
      %s36 = sphi 0, %s33
      %s37 = sphi 0, %s36
      %s53 = sphi 0, %s37
      %s57 = sphi 0, %s57
      %s59 = sphi 0, %s57
      %s60 = sphi 0, %s59
      %s74 = sphi 0, %s60
      %s78 = sphi 0, %s78
      %s80 = sphi 0, %s78
      %s81 = sphi 0, %s80
      %s95 = sphi 0, %s81
      %s101 = sphi 0, %s103
      %s104 = sphi 0, %s101
      %s105 = sphi 0, %s104
      %s121 = sphi 0, %s105
      %s127 = sphi 0, %s129
      %s130 = sphi 0, %s127
      %s131 = sphi 0, %s130
      %s147 = sphi 0, %s131
      %s153 = sphi 0, %s155
      %s156 = sphi 0, %s153
      %s157 = sphi 0, %s156
      %s173 = sphi 0, %s157
      %s179 = sphi 0, %s181
      %s182 = sphi 0, %s179
      %s183 = sphi 0, %s182
      %s199 = sphi 0, %s183
    $region4: #{tpu_custom_call.1} parent=1 // loop_header_branch
      %26 = sbr.rel (%p24) target = $region8
    $region5: #{tpu_custom_call.1} parent=1 // loop_body
      %s28 = ssub.s32 %s23, 1
      %s29 = ssub.s32 %s23, 2
      %s30 = sadd.s32 %s23, 1
      %s31 = ssub.s32 %s23, %s30
      %p32 = scmp.eq.s32.totalorder %s31, 0
      %s34 = sadd.s32 %s33, 1
      %s35 = scalar_select %p32, %s33, %s34
      %p38 = pneg %p32
      %p39 = scmp.eq.s32.totalorder %s23, 1
      %p40 = por %p38, %p39
      %p41 = scmp.ne.s32.totalorder %s33, %s36
      %p42 = scmp.eq.s32.totalorder %s23, 0
      %p43 = por %p41, %p42
      %p44 = scmp.ne.s32.totalorder %s33, %s36
      %p45 = scmp.eq.s32.totalorder %s28, 1
      %p46 = por %p44, %p45
      %p47 = scmp.ne.s32.totalorder %s36, %s37
      %p48 = scmp.eq.s32.totalorder %s28, 0
      %p49 = por %p47, %p48
      %p50 = scmp.ne.s32.totalorder %s36, %s37
      %p51 = scmp.eq.s32.totalorder %s29, 1
      %p52 = por %p50, %p51
      %p54 = scmp.ne.s32.totalorder %s37, %s53
      %p55 = scmp.eq.s32.totalorder %s29, 0
      %p56 = por %p54, %p55
      %s58 = sadd.s32 %s57, 1
      %p61 = scmp.eq.s32.totalorder %s23, 1
      %p62 = scmp.ne.s32.totalorder %s57, %s59
      %p63 = scmp.eq.s32.totalorder %s23, 0
      %p64 = por %p62, %p63
      %p65 = scmp.ne.s32.totalorder %s57, %s59
      %p66 = scmp.eq.s32.totalorder %s28, 1
      %p67 = por %p65, %p66
      %p68 = scmp.ne.s32.totalorder %s59, %s60
      %p69 = scmp.eq.s32.totalorder %s28, 0
      %p70 = por %p68, %p69
      %p71 = scmp.ne.s32.totalorder %s59, %s60
      %p72 = scmp.eq.s32.totalorder %s29, 1
      %p73 = por %p71, %p72
      %p75 = scmp.ne.s32.totalorder %s60, %s74
      %p76 = scmp.eq.s32.totalorder %s29, 0
      %p77 = por %p75, %p76
      %s79 = sadd.s32 %s78, 1
      %p82 = scmp.eq.s32.totalorder %s23, 1
      %p83 = scmp.ne.s32.totalorder %s78, %s80
      %p84 = scmp.eq.s32.totalorder %s23, 0
      %p85 = por %p83, %p84
      %p86 = scmp.ne.s32.totalorder %s78, %s80
      %p87 = scmp.eq.s32.totalorder %s28, 1
      %p88 = por %p86, %p87
      %p89 = scmp.ne.s32.totalorder %s80, %s81
      %p90 = scmp.eq.s32.totalorder %s28, 0
      %p91 = por %p89, %p90
      %p92 = scmp.ne.s32.totalorder %s80, %s81
      %p93 = scmp.eq.s32.totalorder %s29, 1
      %p94 = por %p92, %p93
      %p96 = scmp.ne.s32.totalorder %s81, %s95
      %p97 = scmp.eq.s32.totalorder %s29, 0
      %p98 = por %p96, %p97
      %s99 = ssub.s32 %s23, %s30
      %p100 = scmp.eq.s32.totalorder %s99, 0
      %s102 = sadd.s32 %s101, 1
      %s103 = scalar_select %p100, %s101, %s102
      %p106 = pneg %p100
      %p107 = scmp.eq.s32.totalorder %s23, 1
      %p108 = por %p106, %p107
      %p109 = scmp.ne.s32.totalorder %s101, %s104
      %p110 = scmp.eq.s32.totalorder %s23, 0
      %p111 = por %p109, %p110
      %p112 = scmp.ne.s32.totalorder %s101, %s104
      %p113 = scmp.eq.s32.totalorder %s28, 1
      %p114 = por %p112, %p113
      %p115 = scmp.ne.s32.totalorder %s104, %s105
      %p116 = scmp.eq.s32.totalorder %s28, 0
      %p117 = por %p115, %p116
      %p118 = scmp.ne.s32.totalorder %s104, %s105
      %p119 = scmp.eq.s32.totalorder %s29, 1
      %p120 = por %p118, %p119
      %p122 = scmp.ne.s32.totalorder %s105, %s121
      %p123 = scmp.eq.s32.totalorder %s29, 0
      %p124 = por %p122, %p123
      %s125 = ssub.s32 %s23, %s30
      %p126 = scmp.eq.s32.totalorder %s125, 0
      %s128 = sadd.s32 %s127, 1
      %s129 = scalar_select %p126, %s127, %s128
      %p132 = pneg %p126
      %p133 = scmp.eq.s32.totalorder %s23, 1
      %p134 = por %p132, %p133
      %p135 = scmp.ne.s32.totalorder %s127, %s130
      %p136 = scmp.eq.s32.totalorder %s23, 0
      %p137 = por %p135, %p136
      %p138 = scmp.ne.s32.totalorder %s127, %s130
      %p139 = scmp.eq.s32.totalorder %s28, 1
      %p140 = por %p138, %p139
      %p141 = scmp.ne.s32.totalorder %s130, %s131
      %p142 = scmp.eq.s32.totalorder %s28, 0
      %p143 = por %p141, %p142
      %p144 = scmp.ne.s32.totalorder %s130, %s131
      %p145 = scmp.eq.s32.totalorder %s29, 1
      %p146 = por %p144, %p145
      %p148 = scmp.ne.s32.totalorder %s131, %s147
      %p149 = scmp.eq.s32.totalorder %s29, 0
      %p150 = por %p148, %p149
      %s151 = ssub.s32 %s23, %s30
      %p152 = scmp.eq.s32.totalorder %s151, 0
      %s154 = sadd.s32 %s153, 1
      %s155 = scalar_select %p152, %s153, %s154
      %p158 = pneg %p152
      %p159 = scmp.eq.s32.totalorder %s23, 1
      %p160 = por %p158, %p159
      %p161 = scmp.ne.s32.totalorder %s153, %s156
      %p162 = scmp.eq.s32.totalorder %s23, 0
      %p163 = por %p161, %p162
      %p164 = scmp.ne.s32.totalorder %s153, %s156
      %p165 = scmp.eq.s32.totalorder %s28, 1
      %p166 = por %p164, %p165
      %p167 = scmp.ne.s32.totalorder %s156, %s157
      %p168 = scmp.eq.s32.totalorder %s28, 0
      %p169 = por %p167, %p168
      %p170 = scmp.ne.s32.totalorder %s156, %s157
      %p171 = scmp.eq.s32.totalorder %s29, 1
      %p172 = por %p170, %p171
      %p174 = scmp.ne.s32.totalorder %s157, %s173
      %p175 = scmp.eq.s32.totalorder %s29, 0
      %p176 = por %p174, %p175
      %s177 = ssub.s32 %s23, %s30
      %p178 = scmp.eq.s32.totalorder %s177, 0
      %s180 = sadd.s32 %s179, 1
      %s181 = scalar_select %p178, %s179, %s180
      %p184 = pneg %p178
      %p185 = scmp.eq.s32.totalorder %s23, 1
      %p186 = por %p184, %p185
      %p187 = scmp.ne.s32.totalorder %s179, %s182
      %p188 = scmp.eq.s32.totalorder %s23, 0
      %p189 = por %p187, %p188
      %p190 = scmp.ne.s32.totalorder %s179, %s182
      %p191 = scmp.eq.s32.totalorder %s28, 1
      %p192 = por %p190, %p191
      %p193 = scmp.ne.s32.totalorder %s182, %s183
      %p194 = scmp.eq.s32.totalorder %s28, 0
      %p195 = por %p193, %p194
      %p196 = scmp.ne.s32.totalorder %s182, %s183
      %p197 = scmp.eq.s32.totalorder %s29, 1
      %p198 = por %p196, %p197
      %p200 = scmp.ne.s32.totalorder %s183, %s199
      %p201 = scmp.eq.s32.totalorder %s29, 0
      %p202 = por %p200, %p201
      %p203 = scmp.le.s32.totalorder 1, %s23
      %p204 = scmp.lt.s32.totalorder %s23, 3
      %p205 = pnand %p203, %p204
      %p206 = pneg %p205
      // Predicated region
      $region9: #{tpu_custom_call.1} parent=5 // pred_check
        _
      $region10: #{tpu_custom_call.1} parent=5 // pred_check_branch
        %208 = sbr.rel (%p205) target = $region12
      $region11: #{tpu_custom_call.1} parent=5 // pred_region
        %s209 = ssub.s32 %s23, 1
        // Predicated region
        $region13: #{tpu_custom_call.1} parent=11 // pred_check
          %p210 = pneg %p70
        $region14: #{tpu_custom_call.1} parent=11 // pred_check_branch
          %212 = sbr.rel (%p210) target = $region16
        $region15: #{tpu_custom_call.1} parent=11 // pred_region
          %s214 = ssub.s32 512, 512
          %215 = vsyncadd [#allocation6], %s214
          %s216 = sshll.u32 [#allocation5], 4
          %s217 = int_to_ptr.vmem [resolvable:$true] %s216
          %222 = dma.hbm_to_vmem [thread:$0]  %s1, 512, %s217, [#allocation6], 128, 128, 8
        $region16: #{tpu_custom_call.1} parent=11 // pred_fallthru
          _
        // Predicated region
        $region17: #{tpu_custom_call.1} parent=11 // pred_check
          %p223 = pneg %p91
        $region18: #{tpu_custom_call.1} parent=11 // pred_check_branch
          %225 = sbr.rel (%p223) target = $region20
        $region19: #{tpu_custom_call.1} parent=11 // pred_region
          _
        $region20: #{tpu_custom_call.1} parent=11 // pred_fallthru
          _
      $region12: #{tpu_custom_call.1} parent=5 // pred_fallthru
        _
      %p226 = scmp.lt.s32.totalorder %s23, 2
      // Predicated region
      $region21: #{tpu_custom_call.1} parent=5 // pred_check
        %p227 = pneg %p226
      $region22: #{tpu_custom_call.1} parent=5 // pred_check_branch
        %229 = sbr.rel (%p227) target = $region24
      $region23: #{tpu_custom_call.1} parent=5 // pred_region
        // Predicated region
        $region25: #{tpu_custom_call.1} parent=23 // pred_check
          %p230 = pneg %p43
        $region26: #{tpu_custom_call.1} parent=23 // pred_check_branch
          %232 = sbr.rel (%p230) target = $region28
        $region27: #{tpu_custom_call.1} parent=23 // pred_region
          %s233 = sand.u32 %s23, 1
          %s234 = scalar_lea.sflag [#allocation3], %s233
          %s235 = sand.u32 %s33, 1
          %s236 = smul.addr %s235, 8
          %s237 = scalar_lea.vmem [#allocation2], %s236
          %s239 = ssub.s32 128, 128
          %240 = vsyncadd %s234, %s239
          %s241 = smul.addr %s23, 128
          %s242 = scalar_lea.hbm %s0, %s241
          %s244 = sshll.u32 %s237, 4
          %s245 = int_to_ptr.vmem [resolvable:$true] %s244
          %247 = dma.hbm_to_vmem [thread:$0]  %s242, 128, %s245, %s234
        $region28: #{tpu_custom_call.1} parent=23 // pred_fallthru
          _
        // Predicated region
        $region29: #{tpu_custom_call.1} parent=23 // pred_check
          %p248 = pneg %p111
        $region30: #{tpu_custom_call.1} parent=23 // pred_check_branch
          %250 = sbr.rel (%p248) target = $region32
        $region31: #{tpu_custom_call.1} parent=23 // pred_region
          %s251 = sand.u32 %s23, 1
          %s252 = scalar_lea.sflag [#allocation3], %s251
          %s253 = sand.u32 %s101, 1
          %s254 = smul.addr %s253, 8
          %s255 = scalar_lea.vmem [#allocation7], %s254
          %s257 = ssub.s32 128, 128
          %258 = vsyncadd %s252, %s257
          %s259 = smul.addr %s23, 128
          %s260 = scalar_lea.hbm %s3, %s259
          %s262 = sshll.u32 %s255, 4
          %s263 = int_to_ptr.vmem [resolvable:$true] %s262
          %265 = dma.hbm_to_vmem [thread:$0]  %s260, 128, %s263, %s252
        $region32: #{tpu_custom_call.1} parent=23 // pred_fallthru
          _
      $region24: #{tpu_custom_call.1} parent=5 // pred_fallthru
        _
      %p266 = scmp.le.s32.totalorder 1, %s23
      %p267 = scmp.lt.s32.totalorder %s23, 3
      %p268 = pnand %p266, %p267
      %p269 = pneg %p268
      // Predicated region
      $region33: #{tpu_custom_call.1} parent=5 // pred_check
        _
      $region34: #{tpu_custom_call.1} parent=5 // pred_check_branch
        %271 = sbr.rel (%p268) target = $region36
      $region35: #{tpu_custom_call.1} parent=5 // pred_region
        %s272 = ssub.s32 %s23, 1
        %s273 = sand.u32 %s28, 1
        %s274 = scalar_lea.sflag [#allocation3], %s273
        %s275 = sand.u32 %s36, 1
        %s276 = smul.addr %s275, 8
        %s277 = scalar_lea.vmem [#allocation2], %s276
        // Predicated region
        $region37: #{tpu_custom_call.1} parent=35 // pred_check
          %p278 = pneg %p49
        $region38: #{tpu_custom_call.1} parent=35 // pred_check_branch
          %280 = sbr.rel (%p278) target = $region40
        $region39: #{tpu_custom_call.1} parent=35 // pred_region
          %281 = dma.done %s274, 128
        $region40: #{tpu_custom_call.1} parent=35 // pred_fallthru
          _
        // Predicated region
        $region41: #{tpu_custom_call.1} parent=35 // pred_check
          %p282 = pneg %p70
        $region42: #{tpu_custom_call.1} parent=35 // pred_check_branch
          %284 = sbr.rel (%p282) target = $region44
        $region43: #{tpu_custom_call.1} parent=35 // pred_region
          %285 = dma.done [#allocation6], 512
        $region44: #{tpu_custom_call.1} parent=35 // pred_fallthru
          _
        %s286 = sand.u32 %s28, 1
        %s287 = scalar_lea.sflag [#allocation3], %s286
        %s288 = sand.u32 %s104, 1
        %s289 = smul.addr %s288, 8
        %s290 = scalar_lea.vmem [#allocation7], %s289
        // Predicated region
        $region45: #{tpu_custom_call.1} parent=35 // pred_check
          %p291 = pneg %p117
        $region46: #{tpu_custom_call.1} parent=35 // pred_check_branch
          %293 = sbr.rel (%p291) target = $region48
        $region47: #{tpu_custom_call.1} parent=35 // pred_region
          %294 = dma.done %s287, 128
        $region48: #{tpu_custom_call.1} parent=35 // pred_fallthru
          _
        %s295 = sand.u32 %s28, 1
        %s296 = scalar_lea.sflag [#allocation3], %s295
        %s297 = sand.u32 %s36, 1
        %s298 = smul.addr %s297, 8
        %s299 = scalar_lea.vmem [#allocation2], %s298
        %p300 = pneg %p49
        %p301 = pneg %p46
        %p302 = pneg %p70
        %p303 = pneg %p67
        %p304 = pneg %p91
        %p305 = pneg %p88
        %s306 = sand.u32 %s28, 1
        %s307 = scalar_lea.sflag [#allocation3], %s306
        %s308 = sand.u32 %s104, 1
        %s309 = smul.addr %s308, 8
        %s310 = scalar_lea.vmem [#allocation7], %s309
        %p311 = pneg %p117
        %p312 = pneg %p114
        %p313 = pneg %p143
        %p314 = pneg %p140
        %s315 = sand.u32 %s130, 1
        %s316 = scalar_lea.sflag [#allocation4], %s315
        %s317 = sand.u32 %s130, 1
        %s318 = smul.addr %s317, 8
        %s319 = scalar_lea.vmem [#allocation8], %s318
        %p320 = pneg %p169
        %p321 = pneg %p166
        %s322 = sand.u32 %s28, 1
        %s323 = scalar_lea.sflag [#allocation10], %s322
        %s324 = sand.u32 %s156, 1
        %s325 = smul.addr %s324, 8
        %s326 = scalar_lea.vmem [#allocation9], %s325
        %p327 = pneg %p195
        %p328 = pneg %p192
        %s329 = sand.u32 %s28, 1
        %s330 = scalar_lea.sflag [#allocation10], %s329
        %s331 = sand.u32 %s182, 1
        %s332 = smul.addr %s331, 8
        %s333 = scalar_lea.vmem [#allocation11], %s332
        %v334 = vld [vmem:[%s2] sm:$0x1]
        %v335 = vld [vmem:[%s277] sm:$0xff]
        %v336 = vld [vmem:[#allocation5] sm:$0xff]
        %v337 = vld [vmem:[#allocation5 + $0x8] sm:$0xff]
        %v338 = vld [vmem:[#allocation5 + $0x10] sm:$0xff]
        %v339 = vld [vmem:[#allocation5 + $0x18] sm:$0xff]
        %v341 = vlaneseq
        %v342 = vshrl.u32 %v341, 7
        %v343 = vsub.s32 0, %v342
        %v344 = vrot.slane %v334, %v343
        %vm346 = vcmask 261120
        %v348 = vsel %vm346, %v335, 0
        %350 = vmatprep.subr.mxu0 0.0
        %351 = vmatpush1.msra.mxu0 %v336
        %352 = vmatprep.subr.mxu0 0.0
        %353 = vmatpush1.msra.mxu0 %v337
        %354 = vmatprep.subr.mxu0 0.0
        %355 = vmatpush1.msra.mxu0 %v338
        %356 = vmatprep.subr.mxu0 0.0
        %357 = vmatpush1.msra.mxu0 %v339
        %358 = vmatprep.subr.mxu0 0.0
        %359 = vmatpush1.msra.mxu0 0.0
        %360 = vmatprep.subr.mxu0 0.0
        %361 = vmatpush1.msra.mxu0 0.0
        %362 = vmatprep.subr.mxu0 0.0
        %363 = vmatpush1.msra.mxu0 0.0
        %364 = vmatprep.subr.mxu0 0.0
        %365 = vmatpush1.msra.mxu0 0.0
        %366 = vmatprep.subr.mxu0 0.0
        %367 = vmatpush1.msra.mxu0 0.0
        %368 = vmatprep.subr.mxu0 0.0
        %369 = vmatpush1.msra.mxu0 0.0
        %370 = vmatprep.subr.mxu0 0.0
        %371 = vmatpush1.msra.mxu0 0.0
        %372 = vmatprep.subr.mxu0 0.0
        %373 = vmatpush1.msra.mxu0 0.0
        %374 = vmatprep.subr.mxu0 0.0
        %375 = vmatpush1.msra.mxu0 0.0
        %376 = vmatprep.subr.mxu0 0.0
        %377 = vmatpush1.msra.mxu0 0.0
        %378 = vmatprep.subr.mxu0 0.0
        %379 = vmatpush1.msra.mxu0 0.0
        %380 = vmatprep.subr.mxu0 0.0
        %381 = vmatpush1.msra.mxu0 0.0
        %382 = vmatprep.subr.mxu0 0.0
        %383 = vmatpush1.msra.mxu0 0.0
        %384 = vmatprep.subr.mxu0 0.0
        %385 = vmatpush1.msra.mxu0 0.0
        %386 = vmatprep.subr.mxu0 0.0
        %387 = vmatpush1.msra.mxu0 0.0
        %388 = vmatprep.subr.mxu0 0.0
        %389 = vmatpush1.msra.mxu0 0.0
        %390 = vmatprep.subr.mxu0 0.0
        %391 = vmatpush1.msra.mxu0 0.0
        %392 = vmatprep.subr.mxu0 0.0
        %393 = vmatpush1.msra.mxu0 0.0
        %394 = vmatprep.subr.mxu0 0.0
        %395 = vmatpush1.msra.mxu0 0.0
        %396 = vmatprep.subr.mxu0 0.0
        %397 = vmatpush1.msra.mxu0 0.0
        %398 = vmatprep.subr.mxu0 0.0
        %399 = vmatpush1.msra.mxu0 0.0
        %400 = vmatprep.subr.mxu0 0.0
        %401 = vmatpush1.msra.mxu0 0.0
        %402 = vmatprep.subr.mxu0 0.0
        %403 = vmatpush1.msra.mxu0 0.0
        %404 = vmatprep.subr.mxu0 0.0
        %405 = vmatpush1.msra.mxu0 0.0
        %406 = vmatprep.subr.mxu0 0.0
        %407 = vmatpush1.msra.mxu0 0.0
        %408 = vmatprep.subr.mxu0 0.0
        %409 = vmatpush1.msra.mxu0 0.0
        %410 = vmatprep.subr.mxu0 0.0
        %411 = vmatpush1.msra.mxu0 0.0
        %412 = vmatprep.subr.mxu0 0.0
        %413 = vmatpush1.msra.mxu0 0.0
        %414 = vmatprep.mubr.f32.mxu0 0.0
        %415 = vmatmul.mubr.f32.gmra.mrb[0].mxu0 %v348
        %v416 = vpop.f32.mrb[0].mxu0
        %v417 = vadd.f32 %v344, %v416
        %v418 = vpop.f32.mrb[0].mxu0
        %419 = vdwg.mxu0
        %420 = vst [vmem:[%s319] sm:$0xff] %v417
        %421 = vmax.xlane.f32.xlu0 %v417
        %v422 = vpop.xlane.xlu0 %421
        %v423 = vsub.f32 %v417, %v422
        %v424 = vmul.f32 %v423, 1.442695
        %v425 = vpow.pop %v424
        %426 = vadd.xlane.f32.xlu0 %v425
        %v427 = vpop.xlane.xlu0 %426
        %v428 = vrcp.pop %v427
        %v429 = vmul.f32 %v425, %v428
        %430 = vst [vmem:[%s326] sm:$0xff] %v429
        %v431 = vld [vmem:[%s290] sm:$0xff]
        %v432 = vadd.f32 %v431, 1e-20
        %v433 = vlog2.pop %v432
        %v434 = vmul.f32 %v433, 0.6931472
        %v435 = vsub.f32 0.0, %v434
        %v436 = vadd.f32 %v435, 1e-20
        %v437 = vrcp.pop %v436
        %v438 = vmul.f32 %v425, %v437
        %439 = vadd.xlane.f32.xlu0 %v438
        %v440 = vpop.xlane.xlu0 %439
        %v441 = vrcp.pop %v440
        %v442 = vmul.f32 %v438, %v441
        %443 = vst [vmem:[%s333] sm:$0xff] %v442
        %s444 = sand.u32 %s130, 1
        %s445 = scalar_lea.sflag [#allocation4], %s444
        %s446 = sand.u32 %s130, 1
        %s447 = smul.addr %s446, 8
        %s448 = scalar_lea.vmem [#allocation8], %s447
        %s449 = sand.u32 %s28, 1
        %s450 = scalar_lea.sflag [#allocation10], %s449
        %s451 = sand.u32 %s156, 1
        %s452 = smul.addr %s451, 8
        %s453 = scalar_lea.vmem [#allocation9], %s452
        %s454 = sand.u32 %s28, 1
        %s455 = scalar_lea.sflag [#allocation10], %s454
        %s456 = sand.u32 %s182, 1
        %s457 = smul.addr %s456, 8
        %s458 = scalar_lea.vmem [#allocation11], %s457
        // Predicated region
        $region49: #{tpu_custom_call.1} parent=35 // pred_check
          %p459 = pneg %p140
        $region50: #{tpu_custom_call.1} parent=35 // pred_check_branch
          %461 = sbr.rel (%p459) target = $region52
        $region51: #{tpu_custom_call.1} parent=35 // pred_region
          %s463 = ssub.s32 128, 128
          %464 = vsyncadd %s445, %s463
          %s465 = smul.addr %s28, 128
          %s466 = scalar_lea.hbm %s4, %s465
          %s468 = sshll.u32 %s448, 4
          %s469 = int_to_ptr.vmem [resolvable:$true] %s468
          %471 = dma.vmem_to_hbm [thread:$0]  %s469, 128, %s466, %s445
        $region52: #{tpu_custom_call.1} parent=35 // pred_fallthru
          _
        // Predicated region
        $region53: #{tpu_custom_call.1} parent=35 // pred_check
          %p472 = pneg %p166
        $region54: #{tpu_custom_call.1} parent=35 // pred_check_branch
          %474 = sbr.rel (%p472) target = $region56
        $region55: #{tpu_custom_call.1} parent=35 // pred_region
          %s476 = ssub.s32 128, 128
          %477 = vsyncadd %s450, %s476
          %s478 = smul.addr %s28, 128
          %s479 = scalar_lea.hbm %s5, %s478
          %s481 = sshll.u32 %s453, 4
          %s482 = int_to_ptr.vmem [resolvable:$true] %s481
          %484 = dma.vmem_to_hbm [thread:$0]  %s482, 128, %s479, %s450
        $region56: #{tpu_custom_call.1} parent=35 // pred_fallthru
          _
        // Predicated region
        $region57: #{tpu_custom_call.1} parent=35 // pred_check
          %p485 = pneg %p192
        $region58: #{tpu_custom_call.1} parent=35 // pred_check_branch
          %487 = sbr.rel (%p485) target = $region60
        $region59: #{tpu_custom_call.1} parent=35 // pred_region
          %s489 = ssub.s32 128, 128
          %490 = vsyncadd %s455, %s489
          %s491 = smul.addr %s28, 128
          %s492 = scalar_lea.hbm %s6, %s491
          %s494 = sshll.u32 %s458, 4
          %s495 = int_to_ptr.vmem [resolvable:$true] %s494
          %497 = dma.vmem_to_hbm [thread:$0]  %s495, 128, %s492, %s455
        $region60: #{tpu_custom_call.1} parent=35 // pred_fallthru
          _
      $region36: #{tpu_custom_call.1} parent=5 // pred_fallthru
        _
      %p498 = scmp.le.s32.totalorder 2, %s23
      // Predicated region
      $region61: #{tpu_custom_call.1} parent=5 // pred_check
        %p499 = pneg %p498
      $region62: #{tpu_custom_call.1} parent=5 // pred_check_branch
        %501 = sbr.rel (%p499) target = $region64
      $region63: #{tpu_custom_call.1} parent=5 // pred_region
        %s502 = ssub.s32 %s23, 2
        // Predicated region
        $region65: #{tpu_custom_call.1} parent=63 // pred_check
          %p503 = pneg %p146
        $region66: #{tpu_custom_call.1} parent=63 // pred_check_branch
          %505 = sbr.rel (%p503) target = $region68
        $region67: #{tpu_custom_call.1} parent=63 // pred_region
          %s506 = sand.u32 %s131, 1
          %s507 = scalar_lea.sflag [#allocation4], %s506
          %s508 = sand.u32 %s131, 1
          %s509 = smul.addr %s508, 8
          %s510 = scalar_lea.vmem [#allocation8], %s509
          %511 = dma.done %s507, 128
        $region68: #{tpu_custom_call.1} parent=63 // pred_fallthru
          _
        // Predicated region
        $region69: #{tpu_custom_call.1} parent=63 // pred_check
          %p512 = pneg %p172
        $region70: #{tpu_custom_call.1} parent=63 // pred_check_branch
          %514 = sbr.rel (%p512) target = $region72
        $region71: #{tpu_custom_call.1} parent=63 // pred_region
          %s515 = sand.u32 %s29, 1
          %s516 = scalar_lea.sflag [#allocation10], %s515
          %s517 = sand.u32 %s157, 1
          %s518 = smul.addr %s517, 8
          %s519 = scalar_lea.vmem [#allocation9], %s518
          %520 = dma.done %s516, 128
        $region72: #{tpu_custom_call.1} parent=63 // pred_fallthru
          _
        // Predicated region
        $region73: #{tpu_custom_call.1} parent=63 // pred_check
          %p521 = pneg %p198
        $region74: #{tpu_custom_call.1} parent=63 // pred_check_branch
          %523 = sbr.rel (%p521) target = $region76
        $region75: #{tpu_custom_call.1} parent=63 // pred_region
          %s524 = sand.u32 %s29, 1
          %s525 = scalar_lea.sflag [#allocation10], %s524
          %s526 = sand.u32 %s183, 1
          %s527 = smul.addr %s526, 8
          %s528 = scalar_lea.vmem [#allocation11], %s527
          %529 = dma.done %s525, 128
        $region76: #{tpu_custom_call.1} parent=63 // pred_fallthru
          _
      $region64: #{tpu_custom_call.1} parent=5 // pred_fallthru
        _
    $region6: #{tpu_custom_call.1} parent=1 // loop_footer
      %s27 = sadd.s32 1, %s23
    $region7: #{tpu_custom_call.1} parent=1 // loop_footer_branch
      %22 = sbr.rel target = $region3
    $region8: #{tpu_custom_call.1} parent=1 // loop_exit
      _
    %530 = vsyncpa [#allocation3], 1
    %s531 = scalar_lea.sflag [#allocation3], 1
    %532 = vsyncpa %s531, 1
    %533 = vsyncpa [#allocation6], 1
    %534 = vsyncpa [#allocation4], 1
    %s535 = scalar_lea.sflag [#allocation4], 1
    %536 = vsyncpa %s535, 1
    %537 = vsyncpa [#allocation10], 1
    %s538 = scalar_lea.sflag [#allocation10], 1
    %539 = vsyncpa %s538, 1

</llo_original>
